<compile_context>
chip_gen: v5e
topology: v5e:2x2
jax: 0.10.0
libtpu: 0.0.40
codegen_flags: <defaults>
</compile_context>

<pallas_src>
import functools
import math

import jax
import jax.numpy as jnp
from jax.experimental import pallas as pl
from jax.experimental.pallas import tpu as pltpu

# ---------------------------------------------------------------------------
# Deterministic "ELEMENTS" config (same role as the module __init__ args).
# ---------------------------------------------------------------------------
ELEMENTS = dict(
    BETA_WEIGHT=1.0,
    BETA_REG_WEIGHT=0.0,
    PHI_REG_WEIGHT=0.0001,
    LEAF_REG_WEIGHT=0.0,
    THETA_WEIGHT=0.01,
    UVD24_WEIGHT=1.0,
    XYZ24_WEIGHT=1.0,
    XYZ_SMPL24_WEIGHT=0.0,
    XYZ_SMPL17_WEIGHT=0.0,
    VERTICE_WEIGHT=0.0,
    TWIST_WEIGHT=0.01,
)
SIZE_AVERAGE = True  # matches size_average=True default

# Packed-slab geometry (segments start at 128-aligned lane offsets).
_N_BETA, _N_THETA, _N_TWIST, _N_TRANS, _N_SCALE = 10, 96, 46, 3, 1
_QUAD_USED = _N_BETA + _N_THETA + _N_TWIST + _N_TRANS + _N_SCALE  # 156
_Q = 256                      # padded quad-segment width
_N_UVD = 87
_U = 128                      # padded uvd segment width
_TOTAL_W = 3 * _Q + 3 * _U    # 1152

# Rows per grid step. Double-buffered: 2 * 512 * 1152 * 4B ~ 4.7 MiB VMEM,
# comfortably inside v5e's 16 MiB scoped default and v7x's 64 MiB physical.
_TILE_B = 512


# ---------------------------------------------------------------------------
# Kernel: one batch tile -> one (8,128) block of per-tile partial sums.
#
# Slab column layout (per batch row):
#   [0   :  256)  pred_q  (beta | theta | twist | cam_trans | cam_scale | 0-pad)
#   [256 :  512)  tgt_q   (aligned targets)
#   [512 :  768)  w_q     (weights; sqrt(coeff/(B*D)) and the sw2 gate folded in)
#   [768 :  896)  pred_uvd (87 used)
#   [896 : 1024)  tgt_uvd
#   [1024: 1152)  w_uvd
#
# Output block: lane 0 = quad partial sum, lane 1 = uvd-abs partial sum.
# ---------------------------------------------------------------------------
def _loss_kernel(x_ref, out_ref, *, q_w, u_w):
    o = 3 * q_w

    pred_q = x_ref[:, 0:q_w]
    tgt_q = x_ref[:, q_w:2 * q_w]
    w_q = x_ref[:, 2 * q_w:3 * q_w]
    pred_u = x_ref[:, o:o + u_w]
    tgt_u = x_ref[:, o + u_w:o + 2 * u_w]
    w_u = x_ref[:, o + 2 * u_w:o + 3 * u_w]

    # Fused quadratic term: beta + theta + twist MSEs and the sw2-gated
    # trans/scale MSEs (all weights / denominators pre-folded; pad cols = 0).
    wd = w_q * (pred_q - tgt_q)
    quad = jnp.sum(wd * wd)

    # weighted_l1_loss numerator (the 64x factor is applied in the wrapper).
    osum = jnp.sum(jnp.abs(pred_u - tgt_u) * w_u)

    lane = jax.lax.broadcasted_iota(jnp.int32, out_ref.shape, 1)
    out_ref[...] = jnp.where(lane == 0, quad,
                             jnp.where(lane == 1, osum, 0.0))


# ---------------------------------------------------------------------------
# Wrapper: pack -> batch-tiled pallas_call -> tiny final reduce.
# ---------------------------------------------------------------------------
def l1_loss_dim_smpl_cam(output, labels, elements=ELEMENTS,
                         size_average=SIZE_AVERAGE):
    f32 = lambda x: jnp.asarray(x, jnp.float32)
    B = output["pred_shape"].shape[0]

    pred_shape = f32(output["pred_shape"])                       # (B, 10)
    target_beta = f32(labels["target_beta"])                     # (B, 10)
    smpl_w = f32(labels["target_smpl_weight"])                   # (B, 1)
    pred_theta = f32(output["pred_theta_mats"])                  # (B, 96)
    target_theta = f32(labels["target_theta"])                   # (B, 96)
    theta_w = f32(labels["target_theta_weight"])                 # (B, 96)
    pred_phi = f32(output["pred_phi"]).reshape(B, -1)            # (B, 46)
    target_twist = f32(labels["target_twist"]).reshape(B, -1)    # (B, 46)
    twist_w = f32(labels["target_twist_weight"]).reshape(B, -1)  # (B, 46)
    cam_scale = f32(output["cam_scale"])                         # (B, 1)
    tgt_scale = f32(labels["camera_scale"])                      # (B, 1)

    pred_uvd = f32(output["pred_uvd_jts"]).reshape(B, -1, 3)[:, :29].reshape(B, -1)
    target_uvd = f32(labels["target_uvd_29"])[:, :29 * 3]
    uvd_w = f32(labels["target_weight_29"])[:, :29 * 3]
    xyz_w = f32(labels["target_xyz_weight_24"])[:, :72]

    # smpl_weight := (target_xyz_weight.sum(axis=1) > 3).float()  -> folded into
    # the trans/scale weight columns (exact, since it is 0/1).
    sw2 = (jnp.sum(xyz_w, axis=1, keepdims=True) > 3.0).astype(jnp.float32)

    # Fold top-level loss weights and 1/(B*D) MSE denominators into weights.
    c_beta = math.sqrt(float(elements["BETA_WEIGHT"]) / (B * _N_BETA))
    c_theta = math.sqrt(float(elements["THETA_WEIGHT"]) / (B * _N_THETA))
    c_twist = math.sqrt(float(elements["TWIST_WEIGHT"]) / (B * _N_TWIST))
    c_trans = math.sqrt(1.0 / (B * _N_TRANS))
    c_scale = math.sqrt(1.0 / (B * _N_SCALE))

    if "cam_trans" in output:
        cam_trans = f32(output["cam_trans"])                     # (B, 3)
        tgt_trans = f32(labels["camera_trans"])                  # (B, 3)
        w_trans = jnp.broadcast_to(sw2 * c_trans, (B, _N_TRANS))
    else:
        cam_trans = jnp.zeros((B, _N_TRANS), jnp.float32)
        tgt_trans = jnp.zeros((B, _N_TRANS), jnp.float32)
        w_trans = jnp.zeros((B, _N_TRANS), jnp.float32)

    pad_q = jnp.zeros((B, _Q - _QUAD_USED), jnp.float32)
    pred_q = jnp.concatenate(
        [pred_shape, pred_theta, pred_phi, cam_trans, cam_scale, pad_q], axis=1)
    tgt_q = jnp.concatenate(
        [target_beta, target_theta, target_twist, tgt_trans, tgt_scale, pad_q], axis=1)
    w_q = jnp.concatenate(
        [jnp.broadcast_to(smpl_w * c_beta, (B, _N_BETA)),
         (smpl_w * theta_w) * c_theta,
         twist_w * c_twist,
         w_trans,
         sw2 * c_scale,
         pad_q], axis=1)

    pad_u = jnp.zeros((B, _U - _N_UVD), jnp.float32)
    pred_u = jnp.concatenate([pred_uvd, pad_u], axis=1)
    tgt_u = jnp.concatenate([target_uvd, pad_u], axis=1)
    w_u = jnp.concatenate([uvd_w, pad_u], axis=1)

    x = jnp.concatenate([pred_q, tgt_q, w_q, pred_u, tgt_u, w_u], axis=1)
    assert x.shape == (B, _TOTAL_W)

    # Precompute the weighted_l1_loss denominator on the wrapper side.
    wsum = jnp.sum(uvd_w)

    # Batch tiling: pad B up so the grid covers it exactly (pad rows have
    # zero weights everywhere -> contribute exactly 0 to every partial sum).
    num_tiles = pl.cdiv(B, _TILE_B)
    tile_b = pl.cdiv(pl.cdiv(B, num_tiles), 8) * 8
    b_pad = num_tiles * tile_b
    if b_pad != B:
        x = jnp.pad(x, ((0, b_pad - B), (0, 0)))

    kernel = functools.partial(_loss_kernel, q_w=_Q, u_w=_U)

    cost = pl.CostEstimate(
        flops=int(6 * b_pad * _TOTAL_W),
        transcendentals=0,
        bytes_accessed=int(4 * (b_pad * _TOTAL_W + num_tiles * 8 * 128)),
    )

    partials = pl.pallas_call(
        kernel,
        out_shape=jax.ShapeDtypeStruct((num_tiles * 8, 128), jnp.float32),
        grid=(num_tiles,),
        in_specs=[pl.BlockSpec((tile_b, _TOTAL_W), lambda i: (i, 0))],
        out_specs=pl.BlockSpec((8, 128), lambda i: (i, 0)),
        compiler_params=pltpu.CompilerParams(
            dimension_semantics=("parallel",)),
        cost_estimate=cost,
    )(x)

    partials = partials.reshape(num_tiles, 8, 128)
    quad_sum = jnp.sum(partials[:, 0, 0])
    osum = jnp.sum(partials[:, 0, 1])

    if size_average:
        loss_uvd = jnp.where(wsum > 0.0, osum / jnp.maximum(wsum, 1e-30), osum)
    else:
        loss_uvd = osum

    # NOTE: loss_xyz is computed in the reference module but never added to the
    # returned loss; phi_norm/leaf_norm regularizers are never called in
    # forward, so both are (correctly) omitted here.
    return quad_sum + float(elements["UVD24_WEIGHT"]) * 64.0 * loss_uvd


# ---------------------------------------------------------------------------
# Pure-JAX reference (mirrors the PyTorch forward exactly) for a sanity check.
# (Eager-only: uses a Python `if` on a concrete value for the uvd branch.)
# ---------------------------------------------------------------------------
def _reference(output, labels, elements=ELEMENTS, size_average=SIZE_AVERAGE):
    f32 = lambda x: jnp.asarray(x, jnp.float32)
    mse = lambda a, b: jnp.mean((a - b) ** 2)
    B = output["pred_shape"].shape[0]

    smpl_weight = f32(labels["target_smpl_weight"])
    loss_beta = mse(f32(output["pred_shape"]) * smpl_weight,
                    f32(labels["target_beta"]) * smpl_weight)
    loss_theta = mse(
        f32(output["pred_theta_mats"]) * smpl_weight * f32(labels["target_theta_weight"]),
        f32(labels["target_theta"]) * smpl_weight * f32(labels["target_theta_weight"]))
    loss_twist = mse(f32(output["pred_phi"]) * f32(labels["target_twist_weight"]),
                     f32(labels["target_twist"]) * f32(labels["target_twist_weight"]))

    target_xyz_weight = f32(labels["target_xyz_weight_24"])[:, :72]

    pred_uvd = f32(output["pred_uvd_jts"]).reshape(B, -1, 3)[:, :29].reshape(B, -1)
    target_uvd = f32(labels["target_uvd_29"])[:, :87]
    uvd_w = f32(labels["target_weight_29"])[:, :87]
    out = jnp.abs(pred_uvd * 64.0 - target_uvd * 64.0) * uvd_w
    if size_average and jnp.sum(uvd_w) > 0:
        loss_uvd = jnp.sum(out) / jnp.sum(uvd_w)
    else:
        loss_uvd = jnp.sum(out)

    loss = (loss_beta * elements["BETA_WEIGHT"]
            + loss_theta * elements["THETA_WEIGHT"]
            + loss_twist * elements["TWIST_WEIGHT"]
            + loss_uvd * elements["UVD24_WEIGHT"])

    sw2 = (jnp.sum(target_xyz_weight, axis=1) > 3).astype(jnp.float32)[:, None]
    trans_loss = mse(f32(output["cam_trans"]) * sw2, f32(labels["camera_trans"]) * sw2)
    scale_loss = mse(f32(output["cam_scale"]) * sw2, f32(labels["camera_scale"]) * sw2)
    return loss + trans_loss + scale_loss


if __name__ == "__main__":
    B = 2
    key = jax.random.PRNGKey(0)
    ks = iter(jax.random.split(key, 32))
    rnd = lambda shape, scale=1.0: jax.random.normal(next(ks), shape, jnp.float32) * scale
    runi = lambda shape: jax.random.uniform(next(ks), shape, jnp.float32)

    output = {
        "pred_shape": rnd((B, 10)),
        "pred_theta_mats": rnd((B, 96)),
        "pred_phi": rnd((B, 23, 2)),
        "pred_xyz_jts_29": rnd((B, 87), 0.1),
        "pred_uvd_jts": rnd((B, 87), 0.1),
        "cam_trans": rnd((B, 3)),
        "cam_scale": rnd((B, 1)),
    }
    labels = {
        "target_smpl_weight": runi((B, 1)),
        "target_beta": rnd((B, 10)),
        "target_theta": rnd((B, 96)),
        "target_theta_weight": runi((B, 96)),
        "target_twist": rnd((B, 23, 2)),
        "target_twist_weight": runi((B, 23, 2)),
        "target_xyz_24": rnd((B, 72), 0.1),
        # one batch element passes the (>3) gate, the other fails it
        "target_xyz_weight_24": jnp.concatenate(
            [jnp.ones((1, 72), jnp.float32),
             jnp.full((1, 72), 0.01, jnp.float32)], axis=0),
        "target_uvd_29": rnd((B, 87), 0.1),
        "target_weight_29": runi((B, 87)),
        "camera_trans": rnd((B, 3)),
        "camera_scale": rnd((B, 1)),
    }

    loss = l1_loss_dim_smpl_cam(output, labels)
    loss = jax.block_until_ready(loss)

    ref = _reference(output, labels)
    assert jnp.allclose(loss, ref, rtol=1e-5, atol=1e-5), (loss, ref)
    print("KERNEL_OK")
</pallas_src>

<mosaic_0001>
module attributes {stable_mosaic.version = 11 : i64} {
  func.func @_loss_kernel(%arg0: i32, %arg1: memref<8x1152xf32, #tpu.memory_space<vmem>>, %arg2: memref<8x128xf32, #tpu.memory_space<vmem>>) attributes {dimension_semantics = [#tpu.dimension_semantics<parallel>], iteration_bounds = array<i64: 1>, scalar_prefetch = 0 : i64, scratch_operands = 0 : i64, tpu.core_type = #tpu.core_type<tc>, window_params = [{transform_indices = @transform_0, window_bounds = array<i64: 8, 1152>}, {transform_indices = @transform_1, window_bounds = array<i64: 8, 128>}]} {
    %c0 = arith.constant 0 : index
    %c0_0 = arith.constant 0 : index
    %0 = vector.load %arg1[%c0, %c0_0] : memref<8x1152xf32, #tpu.memory_space<vmem>>, vector<8x256xf32>
    %c0_1 = arith.constant 0 : index
    %c256 = arith.constant 256 : index
    %1 = vector.load %arg1[%c0_1, %c256] : memref<8x1152xf32, #tpu.memory_space<vmem>>, vector<8x256xf32>
    %c0_2 = arith.constant 0 : index
    %c512 = arith.constant 512 : index
    %2 = vector.load %arg1[%c0_2, %c512] : memref<8x1152xf32, #tpu.memory_space<vmem>>, vector<8x256xf32>
    %c0_3 = arith.constant 0 : index
    %c768 = arith.constant 768 : index
    %3 = vector.load %arg1[%c0_3, %c768] : memref<8x1152xf32, #tpu.memory_space<vmem>>, vector<8x128xf32>
    %c0_4 = arith.constant 0 : index
    %c896 = arith.constant 896 : index
    %4 = vector.load %arg1[%c0_4, %c896] : memref<8x1152xf32, #tpu.memory_space<vmem>>, vector<8x128xf32>
    %c0_5 = arith.constant 0 : index
    %c1024 = arith.constant 1024 : index
    %5 = vector.load %arg1[%c0_5, %c1024] : memref<8x1152xf32, #tpu.memory_space<vmem>>, vector<8x128xf32>
    %6 = arith.subf %0, %1 : vector<8x256xf32>
    %7 = arith.mulf %2, %6 : vector<8x256xf32>
    %8 = arith.mulf %7, %7 : vector<8x256xf32>
    %9 = vector.shape_cast %8 : vector<8x256xf32> to vector<1x8x256xf32>
    %cst = arith.constant dense<0.000000e+00> : vector<1xf32>
    %10 = vector.multi_reduction <add>, %9, %cst [1, 2] : vector<1x8x256xf32> to vector<1xf32>
    %11 = vector.shape_cast %10 : vector<1xf32> to vector<1x1x1xf32>
    %12 = vector.extract %11[0, 0, 0] : f32 from vector<1x1x1xf32>
    %13 = arith.subf %3, %4 : vector<8x128xf32>
    %14 = math.absf %13 : vector<8x128xf32>
    %15 = arith.mulf %14, %5 : vector<8x128xf32>
    %16 = vector.shape_cast %15 : vector<8x128xf32> to vector<1x8x128xf32>
    %cst_6 = arith.constant dense<0.000000e+00> : vector<1xf32>
    %17 = vector.multi_reduction <add>, %16, %cst_6 [1, 2] : vector<1x8x128xf32> to vector<1xf32>
    %18 = vector.shape_cast %17 : vector<1xf32> to vector<1x1x1xf32>
    %19 = vector.extract %18[0, 0, 0] : f32 from vector<1x1x1xf32>
    %20 = tpu.iota {dimensions = array<i32: 1>} : vector<8x128xi32>
    %c0_i32 = arith.constant 0 : i32
    %21 = vector.broadcast %c0_i32 : i32 to vector<8x128xi32>
    %22 = arith.cmpi eq, %20, %21 : vector<8x128xi32>
    %c1_i32 = arith.constant 1 : i32
    %23 = vector.broadcast %c1_i32 : i32 to vector<8x128xi32>
    %24 = arith.cmpi eq, %20, %23 : vector<8x128xi32>
    %cst_7 = arith.constant 0.000000e+00 : f32
    %25 = vector.broadcast %19 : f32 to vector<8x128xf32>
    %26 = vector.broadcast %cst_7 : f32 to vector<8x128xf32>
    %27 = arith.select %24, %25, %26 : vector<8x128xi1>, vector<8x128xf32>
    %28 = vector.broadcast %12 : f32 to vector<8x128xf32>
    %29 = arith.select %22, %28, %27 : vector<8x128xi1>, vector<8x128xf32>
    %c0_8 = arith.constant 0 : index
    %c0_9 = arith.constant 0 : index
    %30 = vector.load %arg2[%c0_8, %c0_9] : memref<8x128xf32, #tpu.memory_space<vmem>>, vector<8x128xf32>
    tpu.vector_store %arg2[%c0_8, %c0_9], %29 {strides = array<i32>} : memref<8x128xf32, #tpu.memory_space<vmem>>, vector<8x128xf32>,
    return
  }
  func.func @transform_0(%arg0: i32) -> (i32, i32) {
    %c0_i32 = arith.constant 0 : i32
    %c0_i32_0 = arith.constant 0 : i32
    return %arg0, %c0_i32 : i32, i32
  }
  func.func @transform_1(%arg0: i32) -> (i32, i32) {
    %c0_i32 = arith.constant 0 : i32
    %c0_i32_0 = arith.constant 0 : i32
    return %arg0, %c0_i32 : i32, i32
  }
}

</mosaic_0001>

<llo_original>
// kernel: tpu_custom_call.1
$region0: #{tpu_custom_call.1}
  #allocation0 [shape = 'u32[]', space=smem, size = 0x4, offset = 0x4, fixed_abs, tag = 'smem constant byte address 0x4 - core index']
  #allocation1 [shape = 'u32[72,128]{1,0:T(1,128)}', space=vmem, size = 0x9000, scoped, tag = 'internal scratch']
  %s0 = inlined_call_operand.hbm [shape: f32[8,1152], index: 0, kind: input, shape index: {}]
  %s1 = inlined_call_operand.hbm [shape: f32[8,128], index: 1, kind: output, shape index: {}]
  %s2 = sld [smem:[#allocation0]]
  $region18: #{tpu_custom_call.1} parent=0
    _
  %s4 = ssub.s32 1, %s2
  %s5 = scalar_select 0, %s4, %s2
  $region1: #{tpu_custom_call.1} parent=0
    #allocation2 [shape = 'u8[36864]{0}', space=vmem, size = 0x9000, scoped, tag = 'input window, operand 0, single buffered']
    #allocation3 [shape = 's32[1]{0}', space=sflag, size = 0x4, scoped, tag = 'scoped memory for tpu_custom_call.1']
    #allocation4 [shape = 's32[1]{0}', space=sflag, size = 0x4, scoped, tag = 'scoped memory for tpu_custom_call.1']
    #allocation5 [shape = 'u8[4096]{0}', space=vmem, size = 0x1000, scoped, tag = 'output window, operand 0, single buffered']
    %6 = vsyncpa [#allocation3], 0
    %7 = vsyncpa [#allocation4], 0
    // Predicated region
    $region2: #{tpu_custom_call.1} parent=1 // pred_check
      _
    $region3: #{tpu_custom_call.1} parent=1 // pred_check_branch
      %9 = sbr.rel (0) target = $region5
    $region4: #{tpu_custom_call.1} parent=1 // pred_region
      %11 = vsyncadd [#allocation3], 0
      %s13 = sshll.u32 %s0, 4
      %s14 = int_to_ptr.hbm [resolvable:$true] %s13
      %s15 = sshll.u32 [#allocation2], 4
      %s16 = int_to_ptr.vmem [resolvable:$true] %s15
      %18 = dma.hbm_to_vmem [thread:$0]  %s14, 1152, %s16, [#allocation3]
    $region5: #{tpu_custom_call.1} parent=1 // pred_fallthru
      _
    // Predicated region
    $region6: #{tpu_custom_call.1} parent=1 // pred_check
      _
    $region7: #{tpu_custom_call.1} parent=1 // pred_check_branch
      %20 = sbr.rel (0) target = $region9
    $region8: #{tpu_custom_call.1} parent=1 // pred_region
      %22 = dma.done [#allocation3], 1152
    $region9: #{tpu_custom_call.1} parent=1 // pred_fallthru
      _
    %v23 = vld [vmem:[#allocation2] sm:$0xff]
    %v24 = vld [vmem:[#allocation2 + $0x8] sm:$0xff]
    %v25 = vld [vmem:[#allocation2 + $0x10] sm:$0xff]
    %v26 = vld [vmem:[#allocation2 + $0x18] sm:$0xff]
    %v27 = vld [vmem:[#allocation2 + $0x20] sm:$0xff]
    %v28 = vld [vmem:[#allocation2 + $0x28] sm:$0xff]
    %v29 = vld [vmem:[#allocation2 + $0x30] sm:$0xff]
    %v30 = vld [vmem:[#allocation2 + $0x38] sm:$0xff]
    %v31 = vld [vmem:[#allocation2 + $0x40] sm:$0xff]
    %v32 = vsub.f32 %v23, %v25
    %v33 = vsub.f32 %v24, %v26
    %v34 = vmul.f32 %v27, %v32
    %v35 = vmul.f32 %v28, %v33
    %v36 = vmul.f32 %v34, %v34
    %v37 = vmul.f32 %v35, %v35
    %v38 = vadd.f32 %v36, %v37
    %39 = vadd.xlane.f32.xlu0 %v38
    %v40 = vpop.xlane.xlu0 %39
    %v41 = vrot.slane %v40, 4
    %v42 = vadd.f32 %v40, %v41
    %v43 = vrot.slane %v42, 2
    %v44 = vadd.f32 %v42, %v43
    %v45 = vrot.slane %v44, 1
    %v46 = vadd.f32 %v44, %v45
    %s47 = vtos %v46
    %v48 = vsub.f32 %v29, %v30
    %v49 = vand.u32 2147483647, %v48
    %v50 = vmul.f32 %v49, %v31
    %51 = vadd.xlane.f32.xlu0 %v50
    %v52 = vpop.xlane.xlu0 %51
    %v53 = vrot.slane %v52, 4
    %v54 = vadd.f32 %v52, %v53
    %v55 = vrot.slane %v54, 2
    %v56 = vadd.f32 %v54, %v55
    %v57 = vrot.slane %v56, 1
    %v58 = vadd.f32 %v56, %v57
    %s59 = vtos %v58
    %v60 = vlaneseq
    %v61 = vand.u32 %v60, 127
    %vm62 = vcmp.eq.s32.totalorder %v61, 0
    %vm63 = vcmp.eq.s32.totalorder %v61, 1
    %v64 = vstv %s59
    %v65 = vsel %vm63, %v64, 0.0
    %v66 = vstv %s47
    %v67 = vsel %vm62, %v66, %v65
    %68 = vst [vmem:[#allocation5] sm:$0xff] %v67
    // Predicated region
    $region10: #{tpu_custom_call.1} parent=1 // pred_check
      _
    $region11: #{tpu_custom_call.1} parent=1 // pred_check_branch
      %70 = sbr.rel (0) target = $region13
    $region12: #{tpu_custom_call.1} parent=1 // pred_region
      %72 = vsyncadd [#allocation4], 0
      %s74 = sshll.u32 [#allocation5], 4
      %s75 = int_to_ptr.vmem [resolvable:$true] %s74
      %s76 = sshll.u32 %s1, 4
      %s77 = int_to_ptr.hbm [resolvable:$true] %s76
      %79 = dma.vmem_to_hbm [thread:$0]  %s75, 128, %s77, [#allocation4]
    $region13: #{tpu_custom_call.1} parent=1 // pred_fallthru
      _
    // Predicated region
    $region14: #{tpu_custom_call.1} parent=1 // pred_check
      _
    $region15: #{tpu_custom_call.1} parent=1 // pred_check_branch
      %81 = sbr.rel (0) target = $region17
    $region16: #{tpu_custom_call.1} parent=1 // pred_region
      %83 = dma.done [#allocation4], 128
    $region17: #{tpu_custom_call.1} parent=1 // pred_fallthru
      _
    %84 = vsyncpa [#allocation3], 1
    %85 = vsyncpa [#allocation4], 1

</llo_original>
